<compile_context>
chip_gen: v7x
topology: tpu7x:2x2x1
jax: 0.10.0
libtpu: 0.0.40
codegen_flags: <defaults>
</compile_context>

<pallas_src>
import functools

import jax
import jax.numpy as jnp
from jax import lax
from jax.experimental import pallas as pl
from jax.experimental.pallas import tpu as pltpu


# --------------------------------------------------------------------------------------
# Fused kernel: BN + ReLU + grouped 1x1 conv + cmaxga2 pooling.
# One grid step = Bblk batch images x one Cout tile.
# --------------------------------------------------------------------------------------
def _transition_kernel(xp_ref, wbd_ref, bnp_ref, chp_ref, pcs_ref, o_ref, *, ho, wo, bblk):
    """In-kernel layout is (C, lanes) with flat pooled-spatial S = Ho*Wo on lanes.

    xp_ref : (Bblk, Cin, 4*S) bf16  x decomposed into the 4 phases of the 2x2 stride-2
                                    windows, lane index = p*S + (ho_idx*Wo + wo_idx),
                                    phase p = kh*2 + kw.
    wbd_ref: (Ctile, Cin)     bf16  dense block-diagonal 1x1 conv weight (this cout tile).
    bnp_ref: (Cin, 2)         f32   folded eval-mode BN [scale, shift] columns.
    chp_ref: (Ctile, 24)      f32   packed per-channel taps/biases:
                                      cols 0:4  maxgate taps (phase p)   col 4      mb
                                      cols 5:17 pgate taps (5+4*g+p)     cols 17:20 gbs
                                      cols 20:24 pbs (leaf l)
    pcs_ref: (16,)   SMEM f32       channel-shared pconv taps, index = leaf*4 + phase.
    o_ref  : (Bblk, Ctile, S)       pooled output, already in NCHW (C, Ho*Wo) order.
    """
    s = ho * wo
    scale = bnp_ref[:, 0:1]                      # (Cin, 1) f32
    shift = bnp_ref[:, 1:2]
    wbd = wbd_ref[...]                           # (Ctile, Cin) bf16
    chp = chp_ref[...]                           # (Ctile, 24)  f32

    def col(c):                                  # per-channel column, (Ctile, 1)
        return chp[:, c:c + 1]

    def sigmoid(z):
        # tanh form -> EUP slot, no precise VALU divide (same value as 1/(1+e^-z)).
        return 0.5 * (jnp.tanh(0.5 * z) + 1.0)

    # Edge masks for the stride-1 level-2 gate conv; hoisted out of the batch loop.
    lane = lax.broadcasted_iota(jnp.int32, (chp.shape[0], s), 1)
    in_w = (lane % wo) < (wo - 1)                # not the last output column
    in_h = lane < (ho - 1) * wo                  # not the last output row

    for b in range(bblk):
        # BN + ReLU in f32 (v5e has no bf16 VPU path), applied once to all 4 phases,
        # then ONE lane-dense block-diagonal MXU matmul (bf16 operands, f32 accumulate).
        a = jnp.maximum(xp_ref[b].astype(jnp.float32) * scale + shift, 0.0)   # (Cin, 4S)
        y = jnp.dot(wbd, a.astype(jnp.bfloat16),
                    preferred_element_type=jnp.float32)                        # (Ct, 4S)
        # Static 128-aligned lane slices (S is a multiple of 128 here): no relayout.
        ph = [y[:, p * s:(p + 1) * s] for p in range(4)]

        def dw(w_col0, b_col):                   # depthwise 2x2 stride-2 conv + bias
            acc = col(b_col)
            for p in range(4):
                acc = acc + col(w_col0 + p) * ph[p]
            return acc

        def dw_shared(leaf):                     # channel-shared 2x2 taps (SMEM scalars)
            acc = col(20 + leaf)
            for p in range(4):
                acc = acc + pcs_ref[leaf * 4 + p] * ph[p]
            return acc

        # gated 2x2 stride-2 max-pool branch
        max_out = jnp.maximum(jnp.maximum(ph[0], ph[1]), jnp.maximum(ph[2], ph[3]))
        out = max_out * dw(0, 4)

        # four leaves -> two level-1 nodes (levels == 2)
        nodes = []
        for c in range(2):
            g = sigmoid(dw(5 + 4 * c, 17 + c))
            nodes.append(g * dw_shared(2 * c) + (1.0 - g) * dw_shared(2 * c + 1))
        node0, node1 = nodes

        # level-2 gate: depthwise 2x2 stride-1 conv of node0 zero-padded right/bottom.
        # Spatial shifts over the flat lane axis via XLU rolls + iota edge masks.
        n01 = jnp.where(in_w, pltpu.roll(node0, s - 1, 1), 0.0)                # [h, w+1]
        n10 = jnp.where(in_h, pltpu.roll(node0, s - wo, 1), 0.0)               # [h+1, w]
        n11 = jnp.where(in_w & in_h, pltpu.roll(node0, s - wo - 1, 1), 0.0)    # [h+1, w+1]
        g2 = sigmoid(col(13) * node0 + col(14) * n01 + col(15) * n10
                     + col(16) * n11 + col(19))

        o_ref[b] = (out + node0 * g2 + node1 * (1.0 - g2)).astype(o_ref.dtype)


def _pick_cout_tile(cout):
    if cout <= 64:
        return cout
    for t in (64, 32, 16, 8):
        if cout % t == 0:
            return t
    return cout


# --------------------------------------------------------------------------------------
# Public wrapper: NCHW in / NCHW out, like the PyTorch module.
# --------------------------------------------------------------------------------------
def transition_forward(x_nchw, p, groups):
    n, cin, h, w = x_nchw.shape
    cout = p["conv_w"].shape[0]
    ho, wo = h // 2, w // 2
    s = ho * wo
    cin_g, cout_g = cin // groups, cout // groups

    # Batch blocking: 2 even grid steps when possible (so v7x megacore splits work);
    # single-TC v5e/v6e just run them back-to-back with minimal per-step overhead.
    steps = 2 if (n >= 2 and n % 2 == 0) else 1
    bblk = n // steps
    ctile = _pick_cout_tile(cout)
    n_ct = cout // ctile

    # Only wrapper-side data movement: the stride-2 2x2 window-phase decomposition
    # (a strided spatial gather BlockSpec cannot express).  Emitted directly in bf16
    # (half-size extra pass) and marked fusible into the pallas_call operand.
    xp = (x_nchw.reshape(n, cin, ho, 2, wo, 2)
          .transpose(0, 1, 3, 5, 2, 4)              # (N, Cin, kh, kw, Ho, Wo)
          .reshape(n, cin, 4 * s)
          .astype(jnp.bfloat16))

    # Folded eval-mode BN.
    eps = 1e-5
    scale = p["bn_gamma"] / jnp.sqrt(p["bn_var"] + eps)
    shift = p["bn_beta"] - p["bn_mean"] * scale
    bnp = jnp.stack([scale, shift], axis=1).astype(jnp.float32)              # (Cin, 2)

    # Dense block-diagonal weight for the grouped 1x1 conv (bf16 MXU operand).
    wg = p["conv_w"].reshape(groups, cout_g, cin_g)
    w_bd = (wg[:, :, None, :] *
            jnp.eye(groups, dtype=wg.dtype)[:, None, :, None]).reshape(cout, cin)
    w_bd = w_bd.astype(jnp.bfloat16)

    # Packed per-channel table (Cout, 24); see kernel docstring for the column layout.
    mg = p["maxgate"].reshape(cout, 4)                                       # phase p
    mb = p["mb"][:, None]
    pg = p["pgates"].reshape(cout, 4, 3).transpose(0, 2, 1).reshape(cout, 12)  # 4*g + p
    chp = jnp.concatenate([mg, mb, pg, p["gbs"], p["pbs"]], axis=1).astype(jnp.float32)

    # Channel-shared pconv taps -> 16 SMEM scalars, index = leaf*4 + phase.
    pcs = p["pconvs"].reshape(4, 4).T.reshape(16).astype(jnp.float32)

    kernel = functools.partial(_transition_kernel, ho=ho, wo=wo, bblk=bblk)

    # VMEM budget: double-buffered xp/out blocks + resident weight blocks, capped with
    # headroom under the 64 MiB/TC of v7x.
    xp_blk = bblk * cin * 4 * s * 2
    out_blk = bblk * ctile * s * 4
    w_blk = ctile * cin * 2 + ctile * 24 * 4 + cin * 2 * 4 + 16 * 4
    vmem_limit = int(min(32 * 1024 * 1024,
                         max(4 * 1024 * 1024, 4 * (xp_blk + out_blk + w_blk))))

    out = pl.pallas_call(
        kernel,
        out_shape=jax.ShapeDtypeStruct((n, cout, s), x_nchw.dtype),
        grid=(steps, n_ct),
        in_specs=[
            pl.BlockSpec((bblk, cin, 4 * s), lambda b, c: (b, 0, 0)),  # not re-DMA'd over c
            pl.BlockSpec((ctile, cin), lambda b, c: (c, 0)),
            pl.BlockSpec((cin, 2), lambda b, c: (0, 0)),
            pl.BlockSpec((ctile, 24), lambda b, c: (c, 0)),
            pl.BlockSpec(memory_space=pltpu.MemorySpace.SMEM),
        ],
        out_specs=pl.BlockSpec((bblk, ctile, s), lambda b, c: (b, c, 0)),
        compiler_params=pltpu.CompilerParams(
            dimension_semantics=("parallel", "parallel"),
            vmem_limit_bytes=vmem_limit,
            # Let XLA fuse the phase-decomposition transpose into operand 0.
            allow_input_fusion=[True, False, False, False, False],
        ),
    )(xp, w_bd, bnp, chp, pcs)

    # (N, Cout, Ho*Wo) -> (N, Cout, Ho, Wo): pure reshape, no transpose / extra HBM pass.
    return out.reshape(n, cout, ho, wo)


# --------------------------------------------------------------------------------------
# Pure-JAX (XLA conv) reference, mirrors the PyTorch forward in NCHW.
# mxu_dtype=jnp.bfloat16 reproduces the kernel's bf16 storage / MXU-operand policy
# (x -> bf16 storage, activation & 1x1 weight -> bf16 at the matmul, f32 accumulate).
# --------------------------------------------------------------------------------------
def _sigmoid(x):
    return 1.0 / (1.0 + jnp.exp(-x))


def ref_transition(x_nchw, p, groups, mxu_dtype=None):
    eps = 1e-5
    scale = p["bn_gamma"] / jnp.sqrt(p["bn_var"] + eps)
    shift = p["bn_beta"] - p["bn_mean"] * scale
    xq = x_nchw if mxu_dtype is None else x_nchw.astype(mxu_dtype).astype(jnp.float32)
    y = jnp.maximum(xq * scale[None, :, None, None]
                    + shift[None, :, None, None], 0.0)
    w1 = p["conv_w"][:, :, None, None]
    if mxu_dtype is not None:
        y_in, w_in = y.astype(mxu_dtype), w1.astype(mxu_dtype)
    else:
        y_in, w_in = y, w1
    y = lax.conv_general_dilated(y_in, w_in, (1, 1), "VALID",
                                 dimension_numbers=("NCHW", "OIHW", "NCHW"),
                                 feature_group_count=groups,
                                 preferred_element_type=jnp.float32)
    c = y.shape[1]

    def dw(inp, wk, b, stride):
        o = lax.conv_general_dilated(inp, wk, (stride, stride), "VALID",
                                     dimension_numbers=("NCHW", "OIHW", "NCHW"),
                                     feature_group_count=c)
        return o + b[None, :, None, None]

    max_out = lax.reduce_window(y, -jnp.inf, lax.max, (1, 1, 2, 2), (1, 1, 2, 2), "VALID")
    out = max_out * dw(y, p["maxgate"], p["mb"], 2)
    leaves = []
    for ci in range(2):
        pconv1 = jnp.broadcast_to(p["pconvs"][:, :, :, :, 2 * ci], (c, 1, 2, 2))
        pconv2 = jnp.broadcast_to(p["pconvs"][:, :, :, :, 2 * ci + 1], (c, 1, 2, 2))
        g = _sigmoid(dw(y, p["pgates"][:, :, :, :, ci], p["gbs"][:, ci], 2))
        p1 = dw(y, pconv1, p["pbs"][:, 2 * ci], 2)
        p2 = dw(y, pconv2, p["pbs"][:, 2 * ci + 1], 2)
        leaves += [g * p1, (1.0 - g) * p2]
    nodes = [leaves[0] + leaves[1], leaves[2] + leaves[3]]
    padded = jnp.pad(nodes[0], ((0, 0), (0, 0), (0, 1), (0, 1)))
    g2 = _sigmoid(dw(padded, p["pgates"][:, :, :, :, 2], p["gbs"][:, 2], 1))
    return out + nodes[0] * g2 + nodes[1] * (1.0 - g2)


# --------------------------------------------------------------------------------------
# Deterministic parameter init (the PyTorch module leaves its Parameters uninitialized).
# --------------------------------------------------------------------------------------
def init_params(key, cin, cout, groups):
    ks = jax.random.split(key, 11)
    p = {}
    p["bn_gamma"] = jax.random.uniform(ks[0], (cin,), jnp.float32, 0.5, 1.5)
    p["bn_beta"] = 0.1 * jax.random.normal(ks[1], (cin,), jnp.float32)
    p["bn_mean"] = 0.1 * jax.random.normal(ks[2], (cin,), jnp.float32)   # eval running stats
    p["bn_var"] = jax.random.uniform(ks[3], (cin,), jnp.float32, 0.5, 1.5)
    p["conv_w"] = 0.3 * jax.random.normal(ks[4], (cout, cin // groups), jnp.float32)
    p["maxgate"] = 0.3 * jax.random.normal(ks[5], (cout, 1, 2, 2), jnp.float32)
    p["mb"] = 0.1 * jax.random.normal(ks[6], (cout,), jnp.float32)
    p["pconvs"] = 0.3 * jax.random.normal(ks[7], (1, 1, 2, 2, 4), jnp.float32)
    p["pgates"] = 0.3 * jax.random.normal(ks[8], (cout, 1, 2, 2, 3), jnp.float32)
    p["pbs"] = 0.1 * jax.random.normal(ks[9], (cout, 4), jnp.float32)
    p["gbs"] = 0.1 * jax.random.normal(ks[10], (cout, 3), jnp.float32)
    return p


if __name__ == "__main__":
    key = jax.random.PRNGKey(0)
    kx, kp = jax.random.split(key)
    N, Cin, H, W = 2, 8, 32, 32        # cmaxga2 default width/height = 32
    Cout, groups = 8, 2                # args.group_1x1 = 2

    x = jax.random.normal(kx, (N, Cin, H, W), jnp.float32)
    params = init_params(kp, Cin, Cout, groups)

    fwd = jax.jit(transition_forward, static_argnums=2)
    out = jax.block_until_ready(fwd(x, params, groups))

    # Strict check vs a reference that mirrors the kernel's bf16 storage/MXU policy.
    ref_q = ref_transition(x, params, groups, mxu_dtype=jnp.bfloat16)
    # Sanity check vs the exact f32 module semantics (bf16 quantization noise only).
    ref_f = ref_transition(x, params, groups)

    assert out.shape == ref_f.shape == (N, Cout, H // 2, W // 2)
    err_q = float(jnp.max(jnp.abs(out - ref_q)))
    rel_f = float(jnp.max(jnp.abs(out - ref_f))) / (float(jnp.max(jnp.abs(ref_f))) + 1e-6)
    assert err_q < 2e-3, ("abs err vs bf16-matched ref", err_q)
    assert rel_f < 5e-2, ("rel err vs exact f32 ref", rel_f)
    print("KERNEL_OK")
</pallas_src>

<mosaic_0001>
module attributes {stable_mosaic.version = 11 : i64} {
  func.func @_transition_kernel(%arg0: i32, %arg1: i32, %arg2: memref<1x8x1024xbf16, #tpu.memory_space<vmem>>, %arg3: memref<8x8xbf16, #tpu.memory_space<vmem>>, %arg4: memref<8x2xf32, #tpu.memory_space<vmem>>, %arg5: memref<8x24xf32, #tpu.memory_space<vmem>>, %arg6: memref<16xf32, #tpu.memory_space<smem>>, %arg7: memref<1x8x256xf32, #tpu.memory_space<vmem>>) attributes {dimension_semantics = [#tpu.dimension_semantics<parallel>, #tpu.dimension_semantics<parallel>], iteration_bounds = array<i64: 2, 1>, scalar_prefetch = 0 : i64, scratch_operands = 0 : i64, tpu.core_type = #tpu.core_type<tc>, window_params = [{transform_indices = @transform_0, window_bounds = array<i64: 1, 8, 1024>}, {transform_indices = @transform_1, window_bounds = array<i64: 8, 8>}, {pipeline_mode = #tpu.pipeline_mode<synchronous>, transform_indices = @transform_2, window_bounds = array<i64: 8, 2>}, {transform_indices = @transform_3, window_bounds = array<i64: 8, 24>}, {transform_indices = @transform_4, window_bounds = array<i64: 16>}, {transform_indices = @transform_5, window_bounds = array<i64: 1, 8, 256>}]} {
    %c0 = arith.constant 0 : index
    %c0_0 = arith.constant 0 : index
    %0 = vector.load %arg4[%c0, %c0_0] : memref<8x2xf32, #tpu.memory_space<vmem>>, vector<8x1xf32>
    %c0_1 = arith.constant 0 : index
    %c1 = arith.constant 1 : index
    %1 = vector.load %arg4[%c0_1, %c1] : memref<8x2xf32, #tpu.memory_space<vmem>>, vector<8x1xf32>
    %c0_2 = arith.constant 0 : index
    %c0_3 = arith.constant 0 : index
    %2 = vector.load %arg3[%c0_2, %c0_3] : memref<8x8xbf16, #tpu.memory_space<vmem>>, vector<8x8xbf16>
    %c0_4 = arith.constant 0 : index
    %c0_5 = arith.constant 0 : index
    %3 = vector.load %arg5[%c0_4, %c0_5] : memref<8x24xf32, #tpu.memory_space<vmem>>, vector<8x24xf32>
    %4 = tpu.iota {dimensions = array<i32: 1>} : vector<8x256xi32>
    %c16_i32 = arith.constant 16 : i32
    %c0_i32 = arith.constant 0 : i32
    %5 = arith.cmpi eq, %c16_i32, %c0_i32 : i32
    %c1_i32 = arith.constant 1 : i32
    %6 = arith.select %5, %c1_i32, %c16_i32 : i32
    %7 = vector.broadcast %6 : i32 to vector<8x256xi32>
    %8 = arith.remsi %4, %7 : vector<8x256xi32>
    %c0_i32_6 = arith.constant 0 : i32
    %9 = vector.broadcast %c0_i32_6 : i32 to vector<8x256xi32>
    %10 = arith.cmpi ne, %8, %9 : vector<8x256xi32>
    %c0_i32_7 = arith.constant 0 : i32
    %11 = vector.broadcast %c0_i32_7 : i32 to vector<8x256xi32>
    %12 = arith.cmpi slt, %8, %11 : vector<8x256xi32>
    %c0_i32_8 = arith.constant 0 : i32
    %13 = arith.cmpi slt, %6, %c0_i32_8 : i32
    %14 = vector.broadcast %13 : i1 to vector<8x256xi1>
    %15 = vector.broadcast %14 : vector<8x256xi1> to vector<8x256xi1>
    %16 = arith.xori %12, %15 : vector<8x256xi1>
    %17 = arith.andi %16, %10 : vector<8x256xi1>
    %18 = vector.broadcast %6 : i32 to vector<8x256xi32>
    %19 = arith.addi %8, %18 : vector<8x256xi32>
    %20 = arith.select %17, %19, %8 : vector<8x256xi1>, vector<8x256xi32>
    %c15_i32 = arith.constant 15 : i32
    %21 = vector.broadcast %c15_i32 : i32 to vector<8x256xi32>
    %22 = arith.cmpi slt, %20, %21 : vector<8x256xi32>
    %c240_i32 = arith.constant 240 : i32
    %23 = vector.broadcast %c240_i32 : i32 to vector<8x256xi32>
    %24 = arith.cmpi slt, %4, %23 : vector<8x256xi32>
    %c0_9 = arith.constant 0 : index
    %c0_10 = arith.constant 0 : index
    %c0_11 = arith.constant 0 : index
    %25 = vector.load %arg2[%c0_9, %c0_10, %c0_11] : memref<1x8x1024xbf16, #tpu.memory_space<vmem>>, vector<1x8x1024xbf16>
    %26 = vector.shape_cast %25 : vector<1x8x1024xbf16> to vector<8x1024xbf16>
    %27 = arith.extf %26 : vector<8x1024xbf16> to vector<8x1024xf32>
    %28 = vector.broadcast %0 : vector<8x1xf32> to vector<8x1024xf32>
    %29 = arith.mulf %27, %28 : vector<8x1024xf32>
    %30 = vector.broadcast %1 : vector<8x1xf32> to vector<8x1024xf32>
    %31 = arith.addf %29, %30 : vector<8x1024xf32>
    %cst = arith.constant 0.000000e+00 : f32
    %32 = vector.broadcast %cst : f32 to vector<8x1024xf32>
    %33 = arith.maximumf %31, %32 : vector<8x1024xf32>
    %34 = arith.truncf %33 : vector<8x1024xf32> to vector<8x1024xbf16>
    %cst_12 = arith.constant dense<0.000000e+00> : vector<8x1024xf32>
    %35 = tpu.matmul %2, %34, %cst_12 {dimension_numbers = #tpu.dot_dimension_numbers<[1], [0], [0], [1], [0, 0, 1, 1], [], []>} : vector<8x8xbf16>, vector<8x1024xbf16>, vector<8x1024xf32> -> vector<8x1024xf32>
    %36 = vector.extract_strided_slice %35 {offsets = [0, 0], sizes = [8, 256], strides = [1, 1]} : vector<8x1024xf32> to vector<8x256xf32>
    %37 = vector.extract_strided_slice %35 {offsets = [0, 256], sizes = [8, 256], strides = [1, 1]} : vector<8x1024xf32> to vector<8x256xf32>
    %38 = vector.extract_strided_slice %35 {offsets = [0, 512], sizes = [8, 256], strides = [1, 1]} : vector<8x1024xf32> to vector<8x256xf32>
    %39 = vector.extract_strided_slice %35 {offsets = [0, 768], sizes = [8, 256], strides = [1, 1]} : vector<8x1024xf32> to vector<8x256xf32>
    %40 = arith.maximumf %36, %37 : vector<8x256xf32>
    %41 = arith.maximumf %38, %39 : vector<8x256xf32>
    %42 = arith.maximumf %40, %41 : vector<8x256xf32>
    %43 = vector.extract_strided_slice %3 {offsets = [0, 4], sizes = [8, 1], strides = [1, 1]} : vector<8x24xf32> to vector<8x1xf32>
    %44 = vector.extract_strided_slice %3 {offsets = [0, 0], sizes = [8, 1], strides = [1, 1]} : vector<8x24xf32> to vector<8x1xf32>
    %45 = vector.broadcast %44 : vector<8x1xf32> to vector<8x256xf32>
    %46 = arith.mulf %45, %36 : vector<8x256xf32>
    %47 = vector.broadcast %43 : vector<8x1xf32> to vector<8x256xf32>
    %48 = arith.addf %47, %46 : vector<8x256xf32>
    %49 = vector.extract_strided_slice %3 {offsets = [0, 1], sizes = [8, 1], strides = [1, 1]} : vector<8x24xf32> to vector<8x1xf32>
    %50 = vector.broadcast %49 : vector<8x1xf32> to vector<8x256xf32>
    %51 = arith.mulf %50, %37 : vector<8x256xf32>
    %52 = arith.addf %48, %51 : vector<8x256xf32>
    %53 = vector.extract_strided_slice %3 {offsets = [0, 2], sizes = [8, 1], strides = [1, 1]} : vector<8x24xf32> to vector<8x1xf32>
    %54 = vector.broadcast %53 : vector<8x1xf32> to vector<8x256xf32>
    %55 = arith.mulf %54, %38 : vector<8x256xf32>
    %56 = arith.addf %52, %55 : vector<8x256xf32>
    %57 = vector.extract_strided_slice %3 {offsets = [0, 3], sizes = [8, 1], strides = [1, 1]} : vector<8x24xf32> to vector<8x1xf32>
    %58 = vector.broadcast %57 : vector<8x1xf32> to vector<8x256xf32>
    %59 = arith.mulf %58, %39 : vector<8x256xf32>
    %60 = arith.addf %56, %59 : vector<8x256xf32>
    %61 = arith.mulf %42, %60 : vector<8x256xf32>
    %62 = vector.extract_strided_slice %3 {offsets = [0, 17], sizes = [8, 1], strides = [1, 1]} : vector<8x24xf32> to vector<8x1xf32>
    %63 = vector.extract_strided_slice %3 {offsets = [0, 5], sizes = [8, 1], strides = [1, 1]} : vector<8x24xf32> to vector<8x1xf32>
    %64 = vector.broadcast %63 : vector<8x1xf32> to vector<8x256xf32>
    %65 = arith.mulf %64, %36 : vector<8x256xf32>
    %66 = vector.broadcast %62 : vector<8x1xf32> to vector<8x256xf32>
    %67 = arith.addf %66, %65 : vector<8x256xf32>
    %68 = vector.extract_strided_slice %3 {offsets = [0, 6], sizes = [8, 1], strides = [1, 1]} : vector<8x24xf32> to vector<8x1xf32>
    %69 = vector.broadcast %68 : vector<8x1xf32> to vector<8x256xf32>
    %70 = arith.mulf %69, %37 : vector<8x256xf32>
    %71 = arith.addf %67, %70 : vector<8x256xf32>
    %72 = vector.extract_strided_slice %3 {offsets = [0, 7], sizes = [8, 1], strides = [1, 1]} : vector<8x24xf32> to vector<8x1xf32>
    %73 = vector.broadcast %72 : vector<8x1xf32> to vector<8x256xf32>
    %74 = arith.mulf %73, %38 : vector<8x256xf32>
    %75 = arith.addf %71, %74 : vector<8x256xf32>
    %76 = vector.extract_strided_slice %3 {offsets = [0, 8], sizes = [8, 1], strides = [1, 1]} : vector<8x24xf32> to vector<8x1xf32>
    %77 = vector.broadcast %76 : vector<8x1xf32> to vector<8x256xf32>
    %78 = arith.mulf %77, %39 : vector<8x256xf32>
    %79 = arith.addf %75, %78 : vector<8x256xf32>
    %cst_13 = arith.constant 5.000000e-01 : f32
    %80 = vector.broadcast %cst_13 : f32 to vector<8x256xf32>
    %81 = arith.mulf %80, %79 : vector<8x256xf32>
    %82 = math.tanh %81 : vector<8x256xf32>
    %cst_14 = arith.constant 1.000000e+00 : f32
    %83 = vector.broadcast %cst_14 : f32 to vector<8x256xf32>
    %84 = arith.addf %82, %83 : vector<8x256xf32>
    %cst_15 = arith.constant 5.000000e-01 : f32
    %85 = vector.broadcast %cst_15 : f32 to vector<8x256xf32>
    %86 = arith.mulf %85, %84 : vector<8x256xf32>
    %87 = vector.extract_strided_slice %3 {offsets = [0, 20], sizes = [8, 1], strides = [1, 1]} : vector<8x24xf32> to vector<8x1xf32>
    %c0_16 = arith.constant 0 : index
    %88 = memref.load %arg6[%c0_16] : memref<16xf32, #tpu.memory_space<smem>>
    %89 = vector.broadcast %88 : f32 to vector<8x256xf32>
    %90 = arith.mulf %89, %36 : vector<8x256xf32>
    %91 = vector.broadcast %87 : vector<8x1xf32> to vector<8x256xf32>
    %92 = arith.addf %91, %90 : vector<8x256xf32>
    %c1_17 = arith.constant 1 : index
    %93 = memref.load %arg6[%c1_17] : memref<16xf32, #tpu.memory_space<smem>>
    %94 = vector.broadcast %93 : f32 to vector<8x256xf32>
    %95 = arith.mulf %94, %37 : vector<8x256xf32>
    %96 = arith.addf %92, %95 : vector<8x256xf32>
    %c2 = arith.constant 2 : index
    %97 = memref.load %arg6[%c2] : memref<16xf32, #tpu.memory_space<smem>>
    %98 = vector.broadcast %97 : f32 to vector<8x256xf32>
    %99 = arith.mulf %98, %38 : vector<8x256xf32>
    %100 = arith.addf %96, %99 : vector<8x256xf32>
    %c3 = arith.constant 3 : index
    %101 = memref.load %arg6[%c3] : memref<16xf32, #tpu.memory_space<smem>>
    %102 = vector.broadcast %101 : f32 to vector<8x256xf32>
    %103 = arith.mulf %102, %39 : vector<8x256xf32>
    %104 = arith.addf %100, %103 : vector<8x256xf32>
    %105 = arith.mulf %86, %104 : vector<8x256xf32>
    %cst_18 = arith.constant 1.000000e+00 : f32
    %106 = vector.broadcast %cst_18 : f32 to vector<8x256xf32>
    %107 = arith.subf %106, %86 : vector<8x256xf32>
    %108 = vector.extract_strided_slice %3 {offsets = [0, 21], sizes = [8, 1], strides = [1, 1]} : vector<8x24xf32> to vector<8x1xf32>
    %c4 = arith.constant 4 : index
    %109 = memref.load %arg6[%c4] : memref<16xf32, #tpu.memory_space<smem>>
    %110 = vector.broadcast %109 : f32 to vector<8x256xf32>
    %111 = arith.mulf %110, %36 : vector<8x256xf32>
    %112 = vector.broadcast %108 : vector<8x1xf32> to vector<8x256xf32>
    %113 = arith.addf %112, %111 : vector<8x256xf32>
    %c5 = arith.constant 5 : index
    %114 = memref.load %arg6[%c5] : memref<16xf32, #tpu.memory_space<smem>>
    %115 = vector.broadcast %114 : f32 to vector<8x256xf32>
    %116 = arith.mulf %115, %37 : vector<8x256xf32>
    %117 = arith.addf %113, %116 : vector<8x256xf32>
    %c6 = arith.constant 6 : index
    %118 = memref.load %arg6[%c6] : memref<16xf32, #tpu.memory_space<smem>>
    %119 = vector.broadcast %118 : f32 to vector<8x256xf32>
    %120 = arith.mulf %119, %38 : vector<8x256xf32>
    %121 = arith.addf %117, %120 : vector<8x256xf32>
    %c7 = arith.constant 7 : index
    %122 = memref.load %arg6[%c7] : memref<16xf32, #tpu.memory_space<smem>>
    %123 = vector.broadcast %122 : f32 to vector<8x256xf32>
    %124 = arith.mulf %123, %39 : vector<8x256xf32>
    %125 = arith.addf %121, %124 : vector<8x256xf32>
    %126 = arith.mulf %107, %125 : vector<8x256xf32>
    %127 = arith.addf %105, %126 : vector<8x256xf32>
    %128 = vector.extract_strided_slice %3 {offsets = [0, 18], sizes = [8, 1], strides = [1, 1]} : vector<8x24xf32> to vector<8x1xf32>
    %129 = vector.extract_strided_slice %3 {offsets = [0, 9], sizes = [8, 1], strides = [1, 1]} : vector<8x24xf32> to vector<8x1xf32>
    %130 = vector.broadcast %129 : vector<8x1xf32> to vector<8x256xf32>
    %131 = arith.mulf %130, %36 : vector<8x256xf32>
    %132 = vector.broadcast %128 : vector<8x1xf32> to vector<8x256xf32>
    %133 = arith.addf %132, %131 : vector<8x256xf32>
    %134 = vector.extract_strided_slice %3 {offsets = [0, 10], sizes = [8, 1], strides = [1, 1]} : vector<8x24xf32> to vector<8x1xf32>
    %135 = vector.broadcast %134 : vector<8x1xf32> to vector<8x256xf32>
    %136 = arith.mulf %135, %37 : vector<8x256xf32>
    %137 = arith.addf %133, %136 : vector<8x256xf32>
    %138 = vector.extract_strided_slice %3 {offsets = [0, 11], sizes = [8, 1], strides = [1, 1]} : vector<8x24xf32> to vector<8x1xf32>
    %139 = vector.broadcast %138 : vector<8x1xf32> to vector<8x256xf32>
    %140 = arith.mulf %139, %38 : vector<8x256xf32>
    %141 = arith.addf %137, %140 : vector<8x256xf32>
    %142 = vector.extract_strided_slice %3 {offsets = [0, 12], sizes = [8, 1], strides = [1, 1]} : vector<8x24xf32> to vector<8x1xf32>
    %143 = vector.broadcast %142 : vector<8x1xf32> to vector<8x256xf32>
    %144 = arith.mulf %143, %39 : vector<8x256xf32>
    %145 = arith.addf %141, %144 : vector<8x256xf32>
    %cst_19 = arith.constant 5.000000e-01 : f32
    %146 = vector.broadcast %cst_19 : f32 to vector<8x256xf32>
    %147 = arith.mulf %146, %145 : vector<8x256xf32>
    %148 = math.tanh %147 : vector<8x256xf32>
    %cst_20 = arith.constant 1.000000e+00 : f32
    %149 = vector.broadcast %cst_20 : f32 to vector<8x256xf32>
    %150 = arith.addf %148, %149 : vector<8x256xf32>
    %cst_21 = arith.constant 5.000000e-01 : f32
    %151 = vector.broadcast %cst_21 : f32 to vector<8x256xf32>
    %152 = arith.mulf %151, %150 : vector<8x256xf32>
    %153 = vector.extract_strided_slice %3 {offsets = [0, 22], sizes = [8, 1], strides = [1, 1]} : vector<8x24xf32> to vector<8x1xf32>
    %c8 = arith.constant 8 : index
    %154 = memref.load %arg6[%c8] : memref<16xf32, #tpu.memory_space<smem>>
    %155 = vector.broadcast %154 : f32 to vector<8x256xf32>
    %156 = arith.mulf %155, %36 : vector<8x256xf32>
    %157 = vector.broadcast %153 : vector<8x1xf32> to vector<8x256xf32>
    %158 = arith.addf %157, %156 : vector<8x256xf32>
    %c9 = arith.constant 9 : index
    %159 = memref.load %arg6[%c9] : memref<16xf32, #tpu.memory_space<smem>>
    %160 = vector.broadcast %159 : f32 to vector<8x256xf32>
    %161 = arith.mulf %160, %37 : vector<8x256xf32>
    %162 = arith.addf %158, %161 : vector<8x256xf32>
    %c10 = arith.constant 10 : index
    %163 = memref.load %arg6[%c10] : memref<16xf32, #tpu.memory_space<smem>>
    %164 = vector.broadcast %163 : f32 to vector<8x256xf32>
    %165 = arith.mulf %164, %38 : vector<8x256xf32>
    %166 = arith.addf %162, %165 : vector<8x256xf32>
    %c11 = arith.constant 11 : index
    %167 = memref.load %arg6[%c11] : memref<16xf32, #tpu.memory_space<smem>>
    %168 = vector.broadcast %167 : f32 to vector<8x256xf32>
    %169 = arith.mulf %168, %39 : vector<8x256xf32>
    %170 = arith.addf %166, %169 : vector<8x256xf32>
    %171 = arith.mulf %152, %170 : vector<8x256xf32>
    %cst_22 = arith.constant 1.000000e+00 : f32
    %172 = vector.broadcast %cst_22 : f32 to vector<8x256xf32>
    %173 = arith.subf %172, %152 : vector<8x256xf32>
    %174 = vector.extract_strided_slice %3 {offsets = [0, 23], sizes = [8, 1], strides = [1, 1]} : vector<8x24xf32> to vector<8x1xf32>
    %c12 = arith.constant 12 : index
    %175 = memref.load %arg6[%c12] : memref<16xf32, #tpu.memory_space<smem>>
    %176 = vector.broadcast %175 : f32 to vector<8x256xf32>
    %177 = arith.mulf %176, %36 : vector<8x256xf32>
    %178 = vector.broadcast %174 : vector<8x1xf32> to vector<8x256xf32>
    %179 = arith.addf %178, %177 : vector<8x256xf32>
    %c13 = arith.constant 13 : index
    %180 = memref.load %arg6[%c13] : memref<16xf32, #tpu.memory_space<smem>>
    %181 = vector.broadcast %180 : f32 to vector<8x256xf32>
    %182 = arith.mulf %181, %37 : vector<8x256xf32>
    %183 = arith.addf %179, %182 : vector<8x256xf32>
    %c14 = arith.constant 14 : index
    %184 = memref.load %arg6[%c14] : memref<16xf32, #tpu.memory_space<smem>>
    %185 = vector.broadcast %184 : f32 to vector<8x256xf32>
    %186 = arith.mulf %185, %38 : vector<8x256xf32>
    %187 = arith.addf %183, %186 : vector<8x256xf32>
    %c15 = arith.constant 15 : index
    %188 = memref.load %arg6[%c15] : memref<16xf32, #tpu.memory_space<smem>>
    %189 = vector.broadcast %188 : f32 to vector<8x256xf32>
    %190 = arith.mulf %189, %39 : vector<8x256xf32>
    %191 = arith.addf %187, %190 : vector<8x256xf32>
    %192 = arith.mulf %173, %191 : vector<8x256xf32>
    %193 = arith.addf %171, %192 : vector<8x256xf32>
    %c255_i32 = arith.constant 255 : i32
    %194 = tpu.dynamic_rotate %127 by %c255_i32 dim 1 : vector<8x256xf32>, i32 -> vector<8x256xf32>
    %cst_23 = arith.constant 0.000000e+00 : f32
    %195 = vector.broadcast %cst_23 : f32 to vector<8x256xf32>
    %196 = arith.select %22, %194, %195 : vector<8x256xi1>, vector<8x256xf32>
    %c240_i32_24 = arith.constant 240 : i32
    %197 = tpu.dynamic_rotate %127 by %c240_i32_24 dim 1 : vector<8x256xf32>, i32 -> vector<8x256xf32>
    %cst_25 = arith.constant 0.000000e+00 : f32
    %198 = vector.broadcast %cst_25 : f32 to vector<8x256xf32>
    %199 = arith.select %24, %197, %198 : vector<8x256xi1>, vector<8x256xf32>
    %200 = arith.andi %22, %24 : vector<8x256xi1>
    %c239_i32 = arith.constant 239 : i32
    %201 = tpu.dynamic_rotate %127 by %c239_i32 dim 1 : vector<8x256xf32>, i32 -> vector<8x256xf32>
    %cst_26 = arith.constant 0.000000e+00 : f32
    %202 = vector.broadcast %cst_26 : f32 to vector<8x256xf32>
    %203 = arith.select %200, %201, %202 : vector<8x256xi1>, vector<8x256xf32>
    %204 = vector.extract_strided_slice %3 {offsets = [0, 13], sizes = [8, 1], strides = [1, 1]} : vector<8x24xf32> to vector<8x1xf32>
    %205 = vector.broadcast %204 : vector<8x1xf32> to vector<8x256xf32>
    %206 = arith.mulf %205, %127 : vector<8x256xf32>
    %207 = vector.extract_strided_slice %3 {offsets = [0, 14], sizes = [8, 1], strides = [1, 1]} : vector<8x24xf32> to vector<8x1xf32>
    %208 = vector.broadcast %207 : vector<8x1xf32> to vector<8x256xf32>
    %209 = arith.mulf %208, %196 : vector<8x256xf32>
    %210 = arith.addf %206, %209 : vector<8x256xf32>
    %211 = vector.extract_strided_slice %3 {offsets = [0, 15], sizes = [8, 1], strides = [1, 1]} : vector<8x24xf32> to vector<8x1xf32>
    %212 = vector.broadcast %211 : vector<8x1xf32> to vector<8x256xf32>
    %213 = arith.mulf %212, %199 : vector<8x256xf32>
    %214 = arith.addf %210, %213 : vector<8x256xf32>
    %215 = vector.extract_strided_slice %3 {offsets = [0, 16], sizes = [8, 1], strides = [1, 1]} : vector<8x24xf32> to vector<8x1xf32>
    %216 = vector.broadcast %215 : vector<8x1xf32> to vector<8x256xf32>
    %217 = arith.mulf %216, %203 : vector<8x256xf32>
    %218 = arith.addf %214, %217 : vector<8x256xf32>
    %219 = vector.extract_strided_slice %3 {offsets = [0, 19], sizes = [8, 1], strides = [1, 1]} : vector<8x24xf32> to vector<8x1xf32>
    %220 = vector.broadcast %219 : vector<8x1xf32> to vector<8x256xf32>
    %221 = arith.addf %218, %220 : vector<8x256xf32>
    %cst_27 = arith.constant 5.000000e-01 : f32
    %222 = vector.broadcast %cst_27 : f32 to vector<8x256xf32>
    %223 = arith.mulf %222, %221 : vector<8x256xf32>
    %224 = math.tanh %223 : vector<8x256xf32>
    %cst_28 = arith.constant 1.000000e+00 : f32
    %225 = vector.broadcast %cst_28 : f32 to vector<8x256xf32>
    %226 = arith.addf %224, %225 : vector<8x256xf32>
    %cst_29 = arith.constant 5.000000e-01 : f32
    %227 = vector.broadcast %cst_29 : f32 to vector<8x256xf32>
    %228 = arith.mulf %227, %226 : vector<8x256xf32>
    %229 = arith.mulf %127, %228 : vector<8x256xf32>
    %230 = arith.addf %61, %229 : vector<8x256xf32>
    %cst_30 = arith.constant 1.000000e+00 : f32
    %231 = vector.broadcast %cst_30 : f32 to vector<8x256xf32>
    %232 = arith.subf %231, %228 : vector<8x256xf32>
    %233 = arith.mulf %193, %232 : vector<8x256xf32>
    %234 = arith.addf %230, %233 : vector<8x256xf32>
    %c0_31 = arith.constant 0 : index
    %c0_32 = arith.constant 0 : index
    %c0_33 = arith.constant 0 : index
    %235 = vector.load %arg7[%c0_31, %c0_32, %c0_33] : memref<1x8x256xf32, #tpu.memory_space<vmem>>, vector<1x8x256xf32>
    %236 = vector.shape_cast %235 : vector<1x8x256xf32> to vector<8x256xf32>
    %237 = vector.shape_cast %234 : vector<8x256xf32> to vector<1x8x256xf32>
    tpu.vector_store %arg7[%c0_31, %c0_32, %c0_33], %237 {strides = array<i32>} : memref<1x8x256xf32, #tpu.memory_space<vmem>>, vector<1x8x256xf32>,
    return
  }
  func.func @transform_0(%arg0: i32, %arg1: i32) -> (i32, i32, i32) {
    %c0_i32 = arith.constant 0 : i32
    %c0_i32_0 = arith.constant 0 : i32
    %c0_i32_1 = arith.constant 0 : i32
    return %arg0, %c0_i32, %c0_i32_0 : i32, i32, i32
  }
  func.func @transform_1(%arg0: i32, %arg1: i32) -> (i32, i32) {
    %c0_i32 = arith.constant 0 : i32
    %c0_i32_0 = arith.constant 0 : i32
    return %arg1, %c0_i32 : i32, i32
  }
  func.func @transform_2(%arg0: i32, %arg1: i32) -> (i32, i32) {
    %c0_i32 = arith.constant 0 : i32
    %c0_i32_0 = arith.constant 0 : i32
    %c0_i32_1 = arith.constant 0 : i32
    return %c0_i32, %c0_i32_0 : i32, i32
  }
  func.func @transform_3(%arg0: i32, %arg1: i32) -> (i32, i32) {
    %c0_i32 = arith.constant 0 : i32
    %c0_i32_0 = arith.constant 0 : i32
    return %arg1, %c0_i32 : i32, i32
  }
  func.func @transform_4(%arg0: i32, %arg1: i32) -> i32 {
    %c0_i32 = arith.constant 0 : i32
    %c0_i32_0 = arith.constant 0 : i32
    return %c0_i32 : i32
  }
  func.func @transform_5(%arg0: i32, %arg1: i32) -> (i32, i32, i32) {
    %c0_i32 = arith.constant 0 : i32
    %c0_i32_0 = arith.constant 0 : i32
    return %arg0, %arg1, %c0_i32 : i32, i32, i32
  }
}

</mosaic_0001>

<llo_original>
// kernel: transition_forward.1
$region0: #{transition_forward.1}
  #allocation0 [shape = 'u32[]', space=smem, size = 0x4, offset = 0x4, fixed_abs, tag = 'smem constant byte address 0x4 - core index']
  #allocation1 [shape = 'u32[144,128]{1,0:T(1,128)}', space=vmem, size = 0x12000, scoped, tag = 'internal scratch']
  %s0 = inlined_call_operand.vmem [shape: bf16[2,8,1024], index: 0, kind: input, shape index: {}]
  %s1 = inlined_call_operand.vmem [shape: bf16[8,8], index: 1, kind: input, shape index: {}]
  %s2 = inlined_call_operand.vmem [shape: f32[8,2], index: 2, kind: input, shape index: {}]
  %s3 = inlined_call_operand.vmem [shape: f32[8,24], index: 3, kind: input, shape index: {}]
  %s4 = inlined_call_operand.vmem [shape: f32[16], index: 4, kind: input, shape index: {}]
  %s5 = inlined_call_operand.vmem [shape: f32[2,8,256], index: 5, kind: output, shape index: {}]
  %s6 = sld [smem:[#allocation0]]
  $region57: #{transition_forward.1} parent=0
    _
  %s8 = ssub.s32 1, %s6
  %s9 = scalar_select 0, %s8, %s6
  $region1: #{transition_forward.1} parent=0
    #allocation2 [shape = 'u8[512]{0}', space=smem, size = 0x200, scoped, tag = 'input window, operand 4, single buffered']
    #allocation3 [shape = 's32[2]{0}', space=sflag, size = 0x8, scoped, tag = 'scoped memory for transition_forward.1']
    %10 = vsyncpa [#allocation3], 0
    loop: start=0, step=1, limit=4
    $region2: #{transition_forward.1} parent=1 // loop_pre_header
      _
    $region3: #{transition_forward.1} parent=1 // loop_header
      %s12 = sphi 0, %s16
      %p13 = scmp.ge.s32.totalorder %s12, 4
      %s19 = sphi 0, %s31
      %s20 = sphi 0, %s27
      %s21 = sphi 0, %s19
      %s22 = sphi 0, %s20
      %s23 = sphi 0, %s21
      %s24 = sphi 0, %s22
      %s34 = sphi 0, %s36
      %s37 = sphi 0, %s34
      %s38 = sphi 0, %s37
      %s54 = sphi 0, %s38
      %s60 = sphi 0, %s62
      %s63 = sphi 0, %s60
      %s64 = sphi 0, %s63
      %s80 = sphi 0, %s64
      %s84 = sphi 0, %s84
      %s86 = sphi 0, %s84
      %s87 = sphi 0, %s86
      %s101 = sphi 0, %s87
      %s107 = sphi 0, %s109
      %s110 = sphi 0, %s107
      %s111 = sphi 0, %s110
      %s127 = sphi 0, %s111
      %s131 = sphi 0, %s131
      %s133 = sphi 0, %s131
      %s134 = sphi 0, %s133
      %s148 = sphi 0, %s134
      %s156 = sphi 0, %s158
      %s159 = sphi 0, %s156
      %s160 = sphi 0, %s159
      %s176 = sphi 0, %s160
    $region4: #{transition_forward.1} parent=1 // loop_header_branch
      %15 = sbr.rel (%p13) target = $region8
    $region5: #{transition_forward.1} parent=1 // loop_body
      %s17 = ssub.s32 %s12, 1
      %s18 = ssub.s32 %s12, 2
      %s25 = sadd.s32 1, %s20
      %p26 = scmp.ge.s32.totalorder %s25, 1
      %s27 = scalar_select %p26, 0, %s25
      %s28 = sadd.s32 1, %s19
      %s29 = scalar_select %p26, %s28, %s19
      %p30 = scmp.ge.s32.totalorder %s29, 2
      %s31 = scalar_select %p30, 0, %s29
      %s32 = ssub.s32 %s19, %s31
      %p33 = scmp.eq.s32.totalorder %s32, 0
      %s35 = sadd.s32 %s34, 1
      %s36 = scalar_select %p33, %s34, %s35
      %p39 = pneg %p33
      %p40 = scmp.eq.s32.totalorder %s12, 1
      %p41 = por %p39, %p40
      %p42 = scmp.ne.s32.totalorder %s34, %s37
      %p43 = scmp.eq.s32.totalorder %s12, 0
      %p44 = por %p42, %p43
      %p45 = scmp.ne.s32.totalorder %s34, %s37
      %p46 = scmp.eq.s32.totalorder %s17, 1
      %p47 = por %p45, %p46
      %p48 = scmp.ne.s32.totalorder %s37, %s38
      %p49 = scmp.eq.s32.totalorder %s17, 0
      %p50 = por %p48, %p49
      %p51 = scmp.ne.s32.totalorder %s37, %s38
      %p52 = scmp.eq.s32.totalorder %s18, 1
      %p53 = por %p51, %p52
      %p55 = scmp.ne.s32.totalorder %s38, %s54
      %p56 = scmp.eq.s32.totalorder %s18, 0
      %p57 = por %p55, %p56
      %s58 = ssub.s32 %s20, %s27
      %p59 = scmp.eq.s32.totalorder %s58, 0
      %s61 = sadd.s32 %s60, 1
      %s62 = scalar_select %p59, %s60, %s61
      %p65 = pneg %p59
      %p66 = scmp.eq.s32.totalorder %s12, 1
      %p67 = por %p65, %p66
      %p68 = scmp.ne.s32.totalorder %s60, %s63
      %p69 = scmp.eq.s32.totalorder %s12, 0
      %p70 = por %p68, %p69
      %p71 = scmp.ne.s32.totalorder %s60, %s63
      %p72 = scmp.eq.s32.totalorder %s17, 1
      %p73 = por %p71, %p72
      %p74 = scmp.ne.s32.totalorder %s63, %s64
      %p75 = scmp.eq.s32.totalorder %s17, 0
      %p76 = por %p74, %p75
      %p77 = scmp.ne.s32.totalorder %s63, %s64
      %p78 = scmp.eq.s32.totalorder %s18, 1
      %p79 = por %p77, %p78
      %p81 = scmp.ne.s32.totalorder %s64, %s80
      %p82 = scmp.eq.s32.totalorder %s18, 0
      %p83 = por %p81, %p82
      %s85 = sadd.s32 %s84, 1
      %p88 = scmp.eq.s32.totalorder %s12, 1
      %p89 = scmp.ne.s32.totalorder %s84, %s86
      %p90 = scmp.eq.s32.totalorder %s12, 0
      %p91 = por %p89, %p90
      %p92 = scmp.ne.s32.totalorder %s84, %s86
      %p93 = scmp.eq.s32.totalorder %s17, 1
      %p94 = por %p92, %p93
      %p95 = scmp.ne.s32.totalorder %s86, %s87
      %p96 = scmp.eq.s32.totalorder %s17, 0
      %p97 = por %p95, %p96
      %p98 = scmp.ne.s32.totalorder %s86, %s87
      %p99 = scmp.eq.s32.totalorder %s18, 1
      %p100 = por %p98, %p99
      %p102 = scmp.ne.s32.totalorder %s87, %s101
      %p103 = scmp.eq.s32.totalorder %s18, 0
      %p104 = por %p102, %p103
      %s105 = ssub.s32 %s20, %s27
      %p106 = scmp.eq.s32.totalorder %s105, 0
      %s108 = sadd.s32 %s107, 1
      %s109 = scalar_select %p106, %s107, %s108
      %p112 = pneg %p106
      %p113 = scmp.eq.s32.totalorder %s12, 1
      %p114 = por %p112, %p113
      %p115 = scmp.ne.s32.totalorder %s107, %s110
      %p116 = scmp.eq.s32.totalorder %s12, 0
      %p117 = por %p115, %p116
      %p118 = scmp.ne.s32.totalorder %s107, %s110
      %p119 = scmp.eq.s32.totalorder %s17, 1
      %p120 = por %p118, %p119
      %p121 = scmp.ne.s32.totalorder %s110, %s111
      %p122 = scmp.eq.s32.totalorder %s17, 0
      %p123 = por %p121, %p122
      %p124 = scmp.ne.s32.totalorder %s110, %s111
      %p125 = scmp.eq.s32.totalorder %s18, 1
      %p126 = por %p124, %p125
      %p128 = scmp.ne.s32.totalorder %s111, %s127
      %p129 = scmp.eq.s32.totalorder %s18, 0
      %p130 = por %p128, %p129
      %s132 = sadd.s32 %s131, 1
      %p135 = scmp.eq.s32.totalorder %s12, 1
      %p136 = scmp.ne.s32.totalorder %s131, %s133
      %p137 = scmp.eq.s32.totalorder %s12, 0
      %p138 = por %p136, %p137
      %p139 = scmp.ne.s32.totalorder %s131, %s133
      %p140 = scmp.eq.s32.totalorder %s17, 1
      %p141 = por %p139, %p140
      %p142 = scmp.ne.s32.totalorder %s133, %s134
      %p143 = scmp.eq.s32.totalorder %s17, 0
      %p144 = por %p142, %p143
      %p145 = scmp.ne.s32.totalorder %s133, %s134
      %p146 = scmp.eq.s32.totalorder %s18, 1
      %p147 = por %p145, %p146
      %p149 = scmp.ne.s32.totalorder %s134, %s148
      %p150 = scmp.eq.s32.totalorder %s18, 0
      %p151 = por %p149, %p150
      %s152 = ssub.s32 %s19, %s31
      %s153 = ssub.s32 %s20, %s27
      %s154 = sor.u32 %s152, %s153
      %p155 = scmp.eq.s32.totalorder %s154, 0
      %s157 = sadd.s32 %s156, 1
      %s158 = scalar_select %p155, %s156, %s157
      %p161 = pneg %p155
      %p162 = scmp.eq.s32.totalorder %s12, 1
      %p163 = por %p161, %p162
      %p164 = scmp.ne.s32.totalorder %s156, %s159
      %p165 = scmp.eq.s32.totalorder %s12, 0
      %p166 = por %p164, %p165
      %p167 = scmp.ne.s32.totalorder %s156, %s159
      %p168 = scmp.eq.s32.totalorder %s17, 1
      %p169 = por %p167, %p168
      %p170 = scmp.ne.s32.totalorder %s159, %s160
      %p171 = scmp.eq.s32.totalorder %s17, 0
      %p172 = por %p170, %p171
      %p173 = scmp.ne.s32.totalorder %s159, %s160
      %p174 = scmp.eq.s32.totalorder %s18, 1
      %p175 = por %p173, %p174
      %p177 = scmp.ne.s32.totalorder %s160, %s176
      %p178 = scmp.eq.s32.totalorder %s18, 0
      %p179 = por %p177, %p178
      %p180 = scmp.le.s32.totalorder 1, %s12
      %p181 = scmp.lt.s32.totalorder %s12, 3
      %p182 = pnand %p180, %p181
      %p183 = pneg %p182
      // Predicated region
      $region9: #{transition_forward.1} parent=5 // pred_check
        _
      $region10: #{transition_forward.1} parent=5 // pred_check_branch
        %185 = sbr.rel (%p182) target = $region12
      $region11: #{transition_forward.1} parent=5 // pred_region
        %s186 = ssub.s32 %s12, 1
        // Predicated region
        $region13: #{transition_forward.1} parent=11 // pred_check
          %p187 = pneg %p76
        $region14: #{transition_forward.1} parent=11 // pred_check_branch
          %189 = sbr.rel (%p187) target = $region16
        $region15: #{transition_forward.1} parent=11 // pred_region
          %p190 = scmp.lt.s32.totalorder %s22, 0
          %s191 = scalar_select %p190, %s22, 0
          %s192 = smul.addr %s191, 4
          %s193 = scalar_lea.vmem %s1, %s192
        $region16: #{transition_forward.1} parent=11 // pred_fallthru
          _
        // Predicated region
        $region17: #{transition_forward.1} parent=11 // pred_check
          %p194 = pneg %p97
        $region18: #{transition_forward.1} parent=11 // pred_check_branch
          %196 = sbr.rel (%p194) target = $region20
        $region19: #{transition_forward.1} parent=11 // pred_region
          _
        $region20: #{transition_forward.1} parent=11 // pred_fallthru
          _
        // Predicated region
        $region21: #{transition_forward.1} parent=11 // pred_check
          %p197 = pneg %p123
        $region22: #{transition_forward.1} parent=11 // pred_check_branch
          %199 = sbr.rel (%p197) target = $region24
        $region23: #{transition_forward.1} parent=11 // pred_region
          %p200 = scmp.lt.s32.totalorder %s22, 0
          %s201 = scalar_select %p200, %s22, 0
          %s202 = smul.addr %s201, 8
          %s203 = scalar_lea.vmem %s3, %s202
        $region24: #{transition_forward.1} parent=11 // pred_fallthru
          _
        // Predicated region
        $region25: #{transition_forward.1} parent=11 // pred_check
          %p204 = pneg %p144
        $region26: #{transition_forward.1} parent=11 // pred_check_branch
          %206 = sbr.rel (%p204) target = $region28
        $region27: #{transition_forward.1} parent=11 // pred_region
          %s208 = ssub.s32 16, 16
          %209 = vsyncadd [#allocation3], %s208
          %s211 = sshll.u32 %s4, 4
          %s212 = int_to_ptr.vmem [resolvable:$true] %s211
          %214 = dma.vmem_to_smem %s212, 16, [#allocation2], [#allocation3]
        $region28: #{transition_forward.1} parent=11 // pred_fallthru
          _
      $region12: #{transition_forward.1} parent=5 // pred_fallthru
        _
      %p215 = scmp.lt.s32.totalorder %s12, 2
      // Predicated region
      $region29: #{transition_forward.1} parent=5 // pred_check
        %p216 = pneg %p215
      $region30: #{transition_forward.1} parent=5 // pred_check_branch
        %218 = sbr.rel (%p216) target = $region32
      $region31: #{transition_forward.1} parent=5 // pred_region
        // Predicated region
        $region33: #{transition_forward.1} parent=31 // pred_check
          %p219 = pneg %p44
        $region34: #{transition_forward.1} parent=31 // pred_check_branch
          %221 = sbr.rel (%p219) target = $region36
        $region35: #{transition_forward.1} parent=31 // pred_region
          %p222 = scmp.lt.s32.totalorder %s19, 1
          %s223 = scalar_select %p222, %s19, 1
          %s224 = smul.addr %s223, 8
          %s225 = smul.addr %s224, 4
          %s226 = scalar_lea.vmem %s0, %s225
        $region36: #{transition_forward.1} parent=31 // pred_fallthru
          _
      $region32: #{transition_forward.1} parent=5 // pred_fallthru
        _
      %p227 = scmp.le.s32.totalorder 1, %s12
      %p228 = scmp.lt.s32.totalorder %s12, 3
      %p229 = pnand %p227, %p228
      %p230 = pneg %p229
      // Predicated region
      $region37: #{transition_forward.1} parent=5 // pred_check
        _
      $region38: #{transition_forward.1} parent=5 // pred_check_branch
        %232 = sbr.rel (%p229) target = $region40
      $region39: #{transition_forward.1} parent=5 // pred_region
        %s233 = ssub.s32 %s12, 1
        // Predicated region
        $region41: #{transition_forward.1} parent=39 // pred_check
          %p234 = pneg %p144
        $region42: #{transition_forward.1} parent=39 // pred_check_branch
          %236 = sbr.rel (%p234) target = $region44
        $region43: #{transition_forward.1} parent=39 // pred_region
          %237 = dma.done [#allocation3], 16
        $region44: #{transition_forward.1} parent=39 // pred_fallthru
          _
        %238 = sfence
        %p239 = scmp.lt.s32.totalorder %s21, 1
        %s240 = scalar_select %p239, %s21, 1
        %s241 = smul.addr %s240, 8
        %s242 = smul.addr %s241, 4
        %s243 = scalar_lea.vmem %s0, %s242
        %p244 = pneg %p50
        %p245 = pneg %p47
        %p246 = scmp.lt.s32.totalorder %s22, 0
        %s247 = scalar_select %p246, %s22, 0
        %s248 = smul.addr %s247, 4
        %s249 = scalar_lea.vmem %s1, %s248
        %p250 = pneg %p76
        %p251 = pneg %p73
        %p252 = pneg %p97
        %p253 = pneg %p94
        %p254 = scmp.lt.s32.totalorder %s22, 0
        %s255 = scalar_select %p254, %s22, 0
        %s256 = smul.addr %s255, 8
        %s257 = scalar_lea.vmem %s3, %s256
        %p258 = pneg %p123
        %p259 = pneg %p120
        %p260 = pneg %p144
        %p261 = pneg %p141
        %p262 = pneg %p172
        %p263 = pneg %p169
        %p264 = scmp.lt.s32.totalorder %s21, 1
        %s265 = scalar_select %p264, %s21, 1
        %p266 = scmp.lt.s32.totalorder %s22, 0
        %s267 = scalar_select %p266, %s22, 0
        %s268 = smul.addr %s267, 2
        %s269 = smul.addr %s265, 2
        %s270 = sadd.s32 %s268, %s269
        %s271 = smul.addr %s270, 8
        %s272 = scalar_lea.vmem %s5, %s271
        %p273 = scmp.lt.s32.totalorder %s21, 1
        %s274 = scalar_select %p273, %s21, 1
        %s275 = smul.addr %s274, 8
        %s276 = smul.addr %s275, 4
        %s277 = scalar_lea.vmem %s0, %s276
        %p278 = scmp.lt.s32.totalorder %s22, 0
        %s279 = scalar_select %p278, %s22, 0
        %s280 = smul.addr %s279, 4
        %s281 = scalar_lea.vmem %s1, %s280
        %p282 = scmp.lt.s32.totalorder %s22, 0
        %s283 = scalar_select %p282, %s22, 0
        %s284 = smul.addr %s283, 8
        %s285 = scalar_lea.vmem %s3, %s284
        %p286 = scmp.lt.s32.totalorder %s21, 1
        %s287 = scalar_select %p286, %s21, 1
        %p288 = scmp.lt.s32.totalorder %s22, 0
        %s289 = scalar_select %p288, %s22, 0
        %s290 = smul.addr %s289, 2
        %s291 = smul.addr %s287, 2
        %s292 = sadd.s32 %s290, %s291
        %s293 = smul.addr %s292, 8
        %s294 = scalar_lea.vmem %s5, %s293
        %v296 = vld [vmem:[%s2] sm:$0xff]
        %v297 = vld [vmem:[%s281] sm:$0xf]
        %v298 = vld [vmem:[%s285] sm:$0xff]
        %v299 = vlaneseq
        %v300 = vand.u32 %v299, 127
        %v301 = vadd.s32 %v300, 128
        %vm302 = vcmp.lt.s32.totalorder %v300, 0
        %v303 = vsub.s32 0, %v300
        %v304 = vsel %vm302, %v303, %v300
        %v305 = vshrl.u32 %v304, 4
        %v306 = vand.u32 %v304, 15
        %v307 = vsub.s32 0, %v306
        %v308 = vsel %vm302, %v307, %v306
        %vm309 = vcmp.lt.s32.totalorder %v301, 0
        %v310 = vsub.s32 0, %v301
        %v311 = vsel %vm309, %v310, %v301
        %v312 = vshrl.u32 %v311, 4
        %v313 = vand.u32 %v311, 15
        %v314 = vsub.s32 0, %v313
        %v315 = vsel %vm309, %v314, %v313
        %vm316 = vcmp.ne.s32.totalorder %v308, 0
        %vm317 = vcmp.ne.s32.totalorder %v315, 0
        %vm318 = vcmp.lt.s32.totalorder %v308, 0
        %vm319 = vcmp.lt.s32.totalorder %v315, 0
        %vm320 = vmand %vm318, %vm316
        %vm321 = vmand %vm319, %vm317
        %v322 = vadd.s32 %v308, 16
        %v323 = vadd.s32 %v315, 16
        %v324 = vsel %vm320, %v322, %v308
        %v325 = vsel %vm321, %v323, %v315
        %vm326 = vcmp.lt.s32.totalorder %v324, 15
        %vm327 = vcmp.lt.s32.totalorder %v325, 15
        %vm328 = vcmp.lt.s32.totalorder %v300, 240
        %vm329 = vcmp.lt.s32.totalorder %v301, 240
        %v330 = vld [vmem:[%s277] sm:$0xff]
        %v331 = vld [vmem:[%s277 + $0x8] sm:$0xff]
        %v332 = vld [vmem:[%s277 + $0x10] sm:$0xff]
        %v333 = vld [vmem:[%s277 + $0x18] sm:$0xff]
        %v334 = vunpack.c.l.bf16 %v330
        %v335 = vunpack.c.h.bf16 %v330
        %v336 = vunpack.c.l.bf16 %v331
        %v337 = vunpack.c.h.bf16 %v331
        %v338 = vunpack.c.l.bf16 %v332
        %v339 = vunpack.c.h.bf16 %v332
        %v340 = vunpack.c.l.bf16 %v333
        %v341 = vunpack.c.h.bf16 %v333
        %343 = vset.pattern.permute.xlu0 0
        %344 = vperm.xlu0 %343, %v296
        %v345 = vpop.permute.xlu0 %344
        %v347 = vmul.f32 %v334, %v345
        %v348 = vmul.f32 %v335, %v345
        %v349 = vmul.f32 %v336, %v345
        %v350 = vmul.f32 %v337, %v345
        %v351 = vmul.f32 %v338, %v345
        %v352 = vmul.f32 %v339, %v345
        %v353 = vmul.f32 %v340, %v345
        %v354 = vmul.f32 %v341, %v345
        %355 = vset.pattern.permute.xlu0 1
        %356 = vperm.xlu0 %355, %v296
        %v357 = vpop.permute.xlu0 %356
        %v359 = vadd.f32 %v347, %v357
        %v360 = vadd.f32 %v348, %v357
        %v361 = vadd.f32 %v349, %v357
        %v362 = vadd.f32 %v350, %v357
        %v363 = vadd.f32 %v351, %v357
        %v364 = vadd.f32 %v352, %v357
        %v365 = vadd.f32 %v353, %v357
        %v366 = vadd.f32 %v354, %v357
        %v367 = vmax.f32 %v359, 0.0
        %v368 = vmax.f32 %v360, 0.0
        %v369 = vmax.f32 %v361, 0.0
        %v370 = vmax.f32 %v362, 0.0
        %v371 = vmax.f32 %v363, 0.0
        %v372 = vmax.f32 %v364, 0.0
        %v373 = vmax.f32 %v365, 0.0
        %v374 = vmax.f32 %v366, 0.0
        %v375 = vpack.c.bf16 %v367, %v367
        %v376 = vpack.c.bf16 %v368, %v368
        %v377 = vpack.c.bf16 %v369, %v369
        %v378 = vpack.c.bf16 %v370, %v370
        %v379 = vpack.c.bf16 %v371, %v371
        %v380 = vpack.c.bf16 %v372, %v372
        %v381 = vpack.c.bf16 %v373, %v373
        %v382 = vpack.c.bf16 %v374, %v374
        %vm383 = vcmask 64512
        %v385 = vsel %vm383, %v297, 0
        %vm387 = vcmask 1043456
        %v389 = vsel %vm387, %v375, 0
        %v392 = vsel %vm387, %v376, 0
        %v395 = vsel %vm387, %v377, 0
        %v398 = vsel %vm387, %v378, 0
        %v401 = vsel %vm387, %v379, 0
        %v404 = vsel %vm387, %v380, 0
        %v407 = vsel %vm387, %v381, 0
        %v410 = vsel %vm387, %v382, 0
        %412 = vmatprep.subr.bf16.mxu0 %v392
        %413 = vmatpush1.bf16.msra.mxu0 %v389
        %414 = vmatprep.subr.bf16.mxu0 0
        %415 = vmatpush1.bf16.msra.mxu0 0
        %416 = vmatprep.subr.bf16.mxu0 0
        %417 = vmatpush1.bf16.msra.mxu0 0
        %418 = vmatprep.subr.bf16.mxu0 0
        %419 = vmatpush1.bf16.msra.mxu0 0
        %420 = vmatprep.subr.bf16.mxu0 0
        %421 = vmatpush1.bf16.msra.mxu0 0
        %422 = vmatprep.subr.bf16.mxu0 0
        %423 = vmatpush1.bf16.msra.mxu0 0
        %424 = vmatprep.subr.bf16.mxu0 0
        %425 = vmatpush1.bf16.msra.mxu0 0
        %426 = vmatprep.subr.bf16.mxu0 0
        %427 = vmatpush1.bf16.msra.mxu0 0
        %428 = vmatprep.subr.bf16.mxu0 0
        %429 = vmatpush1.bf16.msra.mxu0 0
        %430 = vmatprep.subr.bf16.mxu0 0
        %431 = vmatpush1.bf16.msra.mxu0 0
        %432 = vmatprep.subr.bf16.mxu0 0
        %433 = vmatpush1.bf16.msra.mxu0 0
        %434 = vmatprep.subr.bf16.mxu0 0
        %435 = vmatpush1.bf16.msra.mxu0 0
        %436 = vmatprep.subr.bf16.mxu0 0
        %437 = vmatpush1.bf16.msra.mxu0 0
        %438 = vmatprep.subr.bf16.mxu0 0
        %439 = vmatpush1.bf16.msra.mxu0 0
        %440 = vmatprep.subr.bf16.mxu0 0
        %441 = vmatpush1.bf16.msra.mxu0 0
        %442 = vmatprep.subr.bf16.mxu0 0
        %443 = vmatpush1.bf16.msra.mxu0 0
        %444 = vmatprep.mubr.bf16.mxu0 0
        %445 = vmatmul.mubr.bf16.gmra.mrb[0].mxu0 %v385
        %v446 = vpop.f32.mrb[0].mxu0
        %v447 = vadd.f32 0.0, %v446
        %v448 = vpop.f32.mrb[0].mxu0
        %v449 = vadd.f32 0.0, %v448
        %v450 = vpop.f32.mrb[0].mxu0
        %v451 = vpop.f32.mrb[0].mxu0
        %452 = vdwg.mxu0
        %453 = vmatprep.subr.bf16.mxu0 %v398
        %454 = vmatpush1.bf16.msra.mxu0 %v395
        %455 = vmatprep.subr.bf16.mxu0 0
        %456 = vmatpush1.bf16.msra.mxu0 0
        %457 = vmatprep.subr.bf16.mxu0 0
        %458 = vmatpush1.bf16.msra.mxu0 0
        %459 = vmatprep.subr.bf16.mxu0 0
        %460 = vmatpush1.bf16.msra.mxu0 0
        %461 = vmatprep.subr.bf16.mxu0 0
        %462 = vmatpush1.bf16.msra.mxu0 0
        %463 = vmatprep.subr.bf16.mxu0 0
        %464 = vmatpush1.bf16.msra.mxu0 0
        %465 = vmatprep.subr.bf16.mxu0 0
        %466 = vmatpush1.bf16.msra.mxu0 0
        %467 = vmatprep.subr.bf16.mxu0 0
        %468 = vmatpush1.bf16.msra.mxu0 0
        %469 = vmatprep.subr.bf16.mxu0 0
        %470 = vmatpush1.bf16.msra.mxu0 0
        %471 = vmatprep.subr.bf16.mxu0 0
        %472 = vmatpush1.bf16.msra.mxu0 0
        %473 = vmatprep.subr.bf16.mxu0 0
        %474 = vmatpush1.bf16.msra.mxu0 0
        %475 = vmatprep.subr.bf16.mxu0 0
        %476 = vmatpush1.bf16.msra.mxu0 0
        %477 = vmatprep.subr.bf16.mxu0 0
        %478 = vmatpush1.bf16.msra.mxu0 0
        %479 = vmatprep.subr.bf16.mxu0 0
        %480 = vmatpush1.bf16.msra.mxu0 0
        %481 = vmatprep.subr.bf16.mxu0 0
        %482 = vmatpush1.bf16.msra.mxu0 0
        %483 = vmatprep.subr.bf16.mxu0 0
        %484 = vmatpush1.bf16.msra.mxu0 0
        %485 = vmatprep.mubr.bf16.mxu0 0
        %486 = vmatmul.mubr.bf16.gmra.mrb[0].mxu0 %v385
        %v487 = vpop.f32.mrb[0].mxu0
        %v488 = vadd.f32 0.0, %v487
        %v489 = vpop.f32.mrb[0].mxu0
        %v490 = vadd.f32 0.0, %v489
        %v491 = vpop.f32.mrb[0].mxu0
        %v492 = vpop.f32.mrb[0].mxu0
        %493 = vdwg.mxu0
        %494 = vmatprep.subr.bf16.mxu0 %v404
        %495 = vmatpush1.bf16.msra.mxu0 %v401
        %496 = vmatprep.subr.bf16.mxu0 0
        %497 = vmatpush1.bf16.msra.mxu0 0
        %498 = vmatprep.subr.bf16.mxu0 0
        %499 = vmatpush1.bf16.msra.mxu0 0
        %500 = vmatprep.subr.bf16.mxu0 0
        %501 = vmatpush1.bf16.msra.mxu0 0
        %502 = vmatprep.subr.bf16.mxu0 0
        %503 = vmatpush1.bf16.msra.mxu0 0
        %504 = vmatprep.subr.bf16.mxu0 0
        %505 = vmatpush1.bf16.msra.mxu0 0
        %506 = vmatprep.subr.bf16.mxu0 0
        %507 = vmatpush1.bf16.msra.mxu0 0
        %508 = vmatprep.subr.bf16.mxu0 0
        %509 = vmatpush1.bf16.msra.mxu0 0
        %510 = vmatprep.subr.bf16.mxu0 0
        %511 = vmatpush1.bf16.msra.mxu0 0
        %512 = vmatprep.subr.bf16.mxu0 0
        %513 = vmatpush1.bf16.msra.mxu0 0
        %514 = vmatprep.subr.bf16.mxu0 0
        %515 = vmatpush1.bf16.msra.mxu0 0
        %516 = vmatprep.subr.bf16.mxu0 0
        %517 = vmatpush1.bf16.msra.mxu0 0
        %518 = vmatprep.subr.bf16.mxu0 0
        %519 = vmatpush1.bf16.msra.mxu0 0
        %520 = vmatprep.subr.bf16.mxu0 0
        %521 = vmatpush1.bf16.msra.mxu0 0
        %522 = vmatprep.subr.bf16.mxu0 0
        %523 = vmatpush1.bf16.msra.mxu0 0
        %524 = vmatprep.subr.bf16.mxu0 0
        %525 = vmatpush1.bf16.msra.mxu0 0
        %526 = vmatprep.mubr.bf16.mxu0 0
        %527 = vmatmul.mubr.bf16.gmra.mrb[0].mxu0 %v385
        %v528 = vpop.f32.mrb[0].mxu0
        %v529 = vadd.f32 0.0, %v528
        %v530 = vpop.f32.mrb[0].mxu0
        %v531 = vadd.f32 0.0, %v530
        %v532 = vpop.f32.mrb[0].mxu0
        %v533 = vpop.f32.mrb[0].mxu0
        %534 = vdwg.mxu0
        %535 = vmatprep.subr.bf16.mxu0 %v410
        %536 = vmatpush1.bf16.msra.mxu0 %v407
        %537 = vmatprep.subr.bf16.mxu0 0
        %538 = vmatpush1.bf16.msra.mxu0 0
        %539 = vmatprep.subr.bf16.mxu0 0
        %540 = vmatpush1.bf16.msra.mxu0 0
        %541 = vmatprep.subr.bf16.mxu0 0
        %542 = vmatpush1.bf16.msra.mxu0 0
        %543 = vmatprep.subr.bf16.mxu0 0
        %544 = vmatpush1.bf16.msra.mxu0 0
        %545 = vmatprep.subr.bf16.mxu0 0
        %546 = vmatpush1.bf16.msra.mxu0 0
        %547 = vmatprep.subr.bf16.mxu0 0
        %548 = vmatpush1.bf16.msra.mxu0 0
        %549 = vmatprep.subr.bf16.mxu0 0
        %550 = vmatpush1.bf16.msra.mxu0 0
        %551 = vmatprep.subr.bf16.mxu0 0
        %552 = vmatpush1.bf16.msra.mxu0 0
        %553 = vmatprep.subr.bf16.mxu0 0
        %554 = vmatpush1.bf16.msra.mxu0 0
        %555 = vmatprep.subr.bf16.mxu0 0
        %556 = vmatpush1.bf16.msra.mxu0 0
        %557 = vmatprep.subr.bf16.mxu0 0
        %558 = vmatpush1.bf16.msra.mxu0 0
        %559 = vmatprep.subr.bf16.mxu0 0
        %560 = vmatpush1.bf16.msra.mxu0 0
        %561 = vmatprep.subr.bf16.mxu0 0
        %562 = vmatpush1.bf16.msra.mxu0 0
        %563 = vmatprep.subr.bf16.mxu0 0
        %564 = vmatpush1.bf16.msra.mxu0 0
        %565 = vmatprep.subr.bf16.mxu0 0
        %566 = vmatpush1.bf16.msra.mxu0 0
        %567 = vmatprep.mubr.bf16.mxu0 0
        %568 = vmatmul.mubr.bf16.gmra.mrb[0].mxu0 %v385
        %v569 = vpop.f32.mrb[0].mxu0
        %v570 = vadd.f32 0.0, %v569
        %v571 = vpop.f32.mrb[0].mxu0
        %v572 = vadd.f32 0.0, %v571
        %v573 = vpop.f32.mrb[0].mxu0
        %v574 = vpop.f32.mrb[0].mxu0
        %575 = vdwg.mxu0
        %v576 = vmax.f32 %v447, %v488
        %v577 = vmax.f32 %v449, %v490
        %v578 = vmax.f32 %v529, %v570
        %v579 = vmax.f32 %v531, %v572
        %v580 = vmax.f32 %v576, %v578
        %v581 = vmax.f32 %v577, %v579
        %583 = vset.pattern.permute.xlu0 0
        %584 = vperm.xlu0 %583, %v298
        %v585 = vpop.permute.xlu0 %584
        %v587 = vmul.f32 %v585, %v447
        %v588 = vmul.f32 %v585, %v449
        %589 = vset.pattern.permute.xlu0 4
        %590 = vperm.xlu0 %589, %v298
        %v591 = vpop.permute.xlu0 %590
        %v593 = vadd.f32 %v591, %v587
        %v594 = vadd.f32 %v591, %v588
        %595 = vset.pattern.permute.xlu0 1
        %596 = vperm.xlu0 %595, %v298
        %v597 = vpop.permute.xlu0 %596
        %v599 = vmul.f32 %v597, %v488
        %v600 = vmul.f32 %v597, %v490
        %v601 = vadd.f32 %v593, %v599
        %v602 = vadd.f32 %v594, %v600
        %603 = vset.pattern.permute.xlu0 2
        %604 = vperm.xlu0 %603, %v298
        %v605 = vpop.permute.xlu0 %604
        %v607 = vmul.f32 %v605, %v529
        %v608 = vmul.f32 %v605, %v531
        %v609 = vadd.f32 %v601, %v607
        %v610 = vadd.f32 %v602, %v608
        %611 = vset.pattern.permute.xlu0 3
        %612 = vperm.xlu0 %611, %v298
        %v613 = vpop.permute.xlu0 %612
        %v615 = vmul.f32 %v613, %v570
        %v616 = vmul.f32 %v613, %v572
        %v617 = vadd.f32 %v609, %v615
        %v618 = vadd.f32 %v610, %v616
        %v619 = vmul.f32 %v580, %v617
        %v620 = vmul.f32 %v581, %v618
        %621 = vset.pattern.permute.xlu0 5
        %622 = vperm.xlu0 %621, %v298
        %v623 = vpop.permute.xlu0 %622
        %v625 = vmul.f32 %v623, %v447
        %v626 = vmul.f32 %v623, %v449
        %627 = vset.pattern.permute.xlu0 17
        %628 = vperm.xlu0 %627, %v298
        %v629 = vpop.permute.xlu0 %628
        %v631 = vadd.f32 %v629, %v625
        %v632 = vadd.f32 %v629, %v626
        %633 = vset.pattern.permute.xlu0 6
        %634 = vperm.xlu0 %633, %v298
        %v635 = vpop.permute.xlu0 %634
        %v637 = vmul.f32 %v635, %v488
        %v638 = vmul.f32 %v635, %v490
        %v639 = vadd.f32 %v631, %v637
        %v640 = vadd.f32 %v632, %v638
        %641 = vset.pattern.permute.xlu0 7
        %642 = vperm.xlu0 %641, %v298
        %v643 = vpop.permute.xlu0 %642
        %v645 = vmul.f32 %v643, %v529
        %v646 = vmul.f32 %v643, %v531
        %v647 = vadd.f32 %v639, %v645
        %v648 = vadd.f32 %v640, %v646
        %649 = vset.pattern.permute.xlu0 8
        %650 = vperm.xlu0 %649, %v298
        %v651 = vpop.permute.xlu0 %650
        %v653 = vmul.f32 %v651, %v570
        %v654 = vmul.f32 %v651, %v572
        %v655 = vadd.f32 %v647, %v653
        %v656 = vadd.f32 %v648, %v654
        %v657 = vmul.f32 %v655, 0.5
        %v658 = vmul.f32 %v656, 0.5
        %v659 = vtanh.pop %v657
        %v660 = vtanh.pop %v658
        %v661 = vadd.f32 %v659, 1.0
        %v662 = vadd.f32 %v660, 1.0
        %v663 = vmul.f32 %v661, 0.5
        %v664 = vmul.f32 %v662, 0.5
        %s665 = sld [smem:[#allocation2]]
        %v666 = vstv %s665
        %v667 = vmul.f32 %v666, %v447
        %v668 = vmul.f32 %v666, %v449
        %669 = vset.pattern.permute.xlu0 20
        %670 = vperm.xlu0 %669, %v298
        %v671 = vpop.permute.xlu0 %670
        %v673 = vadd.f32 %v671, %v667
        %v674 = vadd.f32 %v671, %v668
        %s675 = sld [smem:[#allocation2 + $0x1]]
        %v676 = vstv %s675
        %v677 = vmul.f32 %v676, %v488
        %v678 = vmul.f32 %v676, %v490
        %v679 = vadd.f32 %v673, %v677
        %v680 = vadd.f32 %v674, %v678
        %s681 = sld [smem:[#allocation2 + $0x2]]
        %v682 = vstv %s681
        %v683 = vmul.f32 %v682, %v529
        %v684 = vmul.f32 %v682, %v531
        %v685 = vadd.f32 %v679, %v683
        %v686 = vadd.f32 %v680, %v684
        %s687 = sld [smem:[#allocation2 + $0x3]]
        %v688 = vstv %s687
        %v689 = vmul.f32 %v688, %v570
        %v690 = vmul.f32 %v688, %v572
        %v691 = vadd.f32 %v685, %v689
        %v692 = vadd.f32 %v686, %v690
        %v693 = vmul.f32 %v663, %v691
        %v694 = vmul.f32 %v664, %v692
        %v695 = vsub.f32 1.0, %v663
        %v696 = vsub.f32 1.0, %v664
        %s697 = sld [smem:[#allocation2 + $0x4]]
        %v698 = vstv %s697
        %v699 = vmul.f32 %v698, %v447
        %v700 = vmul.f32 %v698, %v449
        %701 = vset.pattern.permute.xlu0 21
        %702 = vperm.xlu0 %701, %v298
        %v703 = vpop.permute.xlu0 %702
        %v705 = vadd.f32 %v703, %v699
        %v706 = vadd.f32 %v703, %v700
        %s707 = sld [smem:[#allocation2 + $0x5]]
        %v708 = vstv %s707
        %v709 = vmul.f32 %v708, %v488
        %v710 = vmul.f32 %v708, %v490
        %v711 = vadd.f32 %v705, %v709
        %v712 = vadd.f32 %v706, %v710
        %s713 = sld [smem:[#allocation2 + $0x6]]
        %v714 = vstv %s713
        %v715 = vmul.f32 %v714, %v529
        %v716 = vmul.f32 %v714, %v531
        %v717 = vadd.f32 %v711, %v715
        %v718 = vadd.f32 %v712, %v716
        %s719 = sld [smem:[#allocation2 + $0x7]]
        %v720 = vstv %s719
        %v721 = vmul.f32 %v720, %v570
        %v722 = vmul.f32 %v720, %v572
        %v723 = vadd.f32 %v717, %v721
        %v724 = vadd.f32 %v718, %v722
        %v725 = vmul.f32 %v695, %v723
        %v726 = vmul.f32 %v696, %v724
        %v727 = vadd.f32 %v693, %v725
        %v728 = vadd.f32 %v694, %v726
        %729 = vset.pattern.permute.xlu0 9
        %730 = vperm.xlu0 %729, %v298
        %v731 = vpop.permute.xlu0 %730
        %v733 = vmul.f32 %v731, %v447
        %v734 = vmul.f32 %v731, %v449
        %735 = vset.pattern.permute.xlu0 18
        %736 = vperm.xlu0 %735, %v298
        %v737 = vpop.permute.xlu0 %736
        %v739 = vadd.f32 %v737, %v733
        %v740 = vadd.f32 %v737, %v734
        %741 = vset.pattern.permute.xlu0 10
        %742 = vperm.xlu0 %741, %v298
        %v743 = vpop.permute.xlu0 %742
        %v745 = vmul.f32 %v743, %v488
        %v746 = vmul.f32 %v743, %v490
        %v747 = vadd.f32 %v739, %v745
        %v748 = vadd.f32 %v740, %v746
        %749 = vset.pattern.permute.xlu0 11
        %750 = vperm.xlu0 %749, %v298
        %v751 = vpop.permute.xlu0 %750
        %v753 = vmul.f32 %v751, %v529
        %v754 = vmul.f32 %v751, %v531
        %v755 = vadd.f32 %v747, %v753
        %v756 = vadd.f32 %v748, %v754
        %757 = vset.pattern.permute.xlu0 12
        %758 = vperm.xlu0 %757, %v298
        %v759 = vpop.permute.xlu0 %758
        %v761 = vmul.f32 %v759, %v570
        %v762 = vmul.f32 %v759, %v572
        %v763 = vadd.f32 %v755, %v761
        %v764 = vadd.f32 %v756, %v762
        %v765 = vmul.f32 %v763, 0.5
        %v766 = vmul.f32 %v764, 0.5
        %v767 = vtanh.pop %v765
        %v768 = vtanh.pop %v766
        %v769 = vadd.f32 %v767, 1.0
        %v770 = vadd.f32 %v768, 1.0
        %v771 = vmul.f32 %v769, 0.5
        %v772 = vmul.f32 %v770, 0.5
        %s773 = sld [smem:[#allocation2 + $0x8]]
        %v774 = vstv %s773
        %v775 = vmul.f32 %v774, %v447
        %v776 = vmul.f32 %v774, %v449
        %777 = vset.pattern.permute.xlu0 22
        %778 = vperm.xlu0 %777, %v298
        %v779 = vpop.permute.xlu0 %778
        %v781 = vadd.f32 %v779, %v775
        %v782 = vadd.f32 %v779, %v776
        %s783 = sld [smem:[#allocation2 + $0x9]]
        %v784 = vstv %s783
        %v785 = vmul.f32 %v784, %v488
        %v786 = vmul.f32 %v784, %v490
        %v787 = vadd.f32 %v781, %v785
        %v788 = vadd.f32 %v782, %v786
        %s789 = sld [smem:[#allocation2 + $0xa]]
        %v790 = vstv %s789
        %v791 = vmul.f32 %v790, %v529
        %v792 = vmul.f32 %v790, %v531
        %v793 = vadd.f32 %v787, %v791
        %v794 = vadd.f32 %v788, %v792
        %s795 = sld [smem:[#allocation2 + $0xb]]
        %v796 = vstv %s795
        %v797 = vmul.f32 %v796, %v570
        %v798 = vmul.f32 %v796, %v572
        %v799 = vadd.f32 %v793, %v797
        %v800 = vadd.f32 %v794, %v798
        %v801 = vmul.f32 %v771, %v799
        %v802 = vmul.f32 %v772, %v800
        %v803 = vsub.f32 1.0, %v771
        %v804 = vsub.f32 1.0, %v772
        %s805 = sld [smem:[#allocation2 + $0xc]]
        %v806 = vstv %s805
        %v807 = vmul.f32 %v806, %v447
        %v808 = vmul.f32 %v806, %v449
        %809 = vset.pattern.permute.xlu0 23
        %810 = vperm.xlu0 %809, %v298
        %v811 = vpop.permute.xlu0 %810
        %v813 = vadd.f32 %v811, %v807
        %v814 = vadd.f32 %v811, %v808
        %s815 = sld [smem:[#allocation2 + $0xd]]
        %v816 = vstv %s815
        %v817 = vmul.f32 %v816, %v488
        %v818 = vmul.f32 %v816, %v490
        %v819 = vadd.f32 %v813, %v817
        %v820 = vadd.f32 %v814, %v818
        %s821 = sld [smem:[#allocation2 + $0xe]]
        %v822 = vstv %s821
        %v823 = vmul.f32 %v822, %v529
        %v824 = vmul.f32 %v822, %v531
        %v825 = vadd.f32 %v819, %v823
        %v826 = vadd.f32 %v820, %v824
        %s827 = sld [smem:[#allocation2 + $0xf]]
        %v828 = vstv %s827
        %v829 = vmul.f32 %v828, %v570
        %v830 = vmul.f32 %v828, %v572
        %v831 = vadd.f32 %v825, %v829
        %v832 = vadd.f32 %v826, %v830
        %v833 = vmul.f32 %v803, %v831
        %v834 = vmul.f32 %v804, %v832
        %v835 = vadd.f32 %v801, %v833
        %v836 = vadd.f32 %v802, %v834
        %837 = vrot.lane.b32.xlu0 %v727, 127
        %v838 = vpop.permute.xlu0 %837
        %839 = vrot.lane.b32.xlu0 %v728, 127
        %v840 = vpop.permute.xlu0 %839
        %vm841 = vcmp.lt.s32.totalorder %v300, 127
        %v842 = vsel %vm841, %v838, %v840
        %v843 = vsel %vm841, %v840, %v838
        %v844 = vsel %vm326, %v842, 0.0
        %v845 = vsel %vm327, %v843, 0.0
        %846 = vrot.lane.b32.xlu0 %v727, 112
        %v847 = vpop.permute.xlu0 %846
        %848 = vrot.lane.b32.xlu0 %v728, 112
        %v849 = vpop.permute.xlu0 %848
        %vm850 = vcmp.lt.s32.totalorder %v300, 112
        %v851 = vsel %vm850, %v847, %v849
        %v852 = vsel %vm850, %v849, %v847
        %v853 = vsel %vm328, %v851, 0.0
        %v854 = vsel %vm329, %v852, 0.0
        %vm855 = vmand %vm326, %vm328
        %vm856 = vmand %vm327, %vm329
        %857 = vrot.lane.b32.xlu0 %v727, 111
        %v858 = vpop.permute.xlu0 %857
        %859 = vrot.lane.b32.xlu0 %v728, 111
        %v860 = vpop.permute.xlu0 %859
        %vm861 = vcmp.lt.s32.totalorder %v300, 111
        %v862 = vsel %vm861, %v858, %v860
        %v863 = vsel %vm861, %v860, %v858
        %v864 = vsel %vm855, %v862, 0.0
        %v865 = vsel %vm856, %v863, 0.0
        %866 = vset.pattern.permute.xlu0 13
        %867 = vperm.xlu0 %866, %v298
        %v868 = vpop.permute.xlu0 %867
        %v870 = vmul.f32 %v868, %v727
        %v871 = vmul.f32 %v868, %v728
        %872 = vset.pattern.permute.xlu0 14
        %873 = vperm.xlu0 %872, %v298
        %v874 = vpop.permute.xlu0 %873
        %v876 = vmul.f32 %v874, %v844
        %v877 = vmul.f32 %v874, %v845
        %v878 = vadd.f32 %v870, %v876
        %v879 = vadd.f32 %v871, %v877
        %880 = vset.pattern.permute.xlu0 15
        %881 = vperm.xlu0 %880, %v298
        %v882 = vpop.permute.xlu0 %881
        %v884 = vmul.f32 %v882, %v853
        %v885 = vmul.f32 %v882, %v854
        %v886 = vadd.f32 %v878, %v884
        %v887 = vadd.f32 %v879, %v885
        %888 = vset.pattern.permute.xlu0 16
        %889 = vperm.xlu0 %888, %v298
        %v890 = vpop.permute.xlu0 %889
        %v892 = vmul.f32 %v890, %v864
        %v893 = vmul.f32 %v890, %v865
        %v894 = vadd.f32 %v886, %v892
        %v895 = vadd.f32 %v887, %v893
        %896 = vset.pattern.permute.xlu0 19
        %897 = vperm.xlu0 %896, %v298
        %v898 = vpop.permute.xlu0 %897
        %v900 = vadd.f32 %v894, %v898
        %v901 = vadd.f32 %v895, %v898
        %v902 = vmul.f32 %v900, 0.5
        %v903 = vmul.f32 %v901, 0.5
        %v904 = vtanh.pop %v902
        %v905 = vtanh.pop %v903
        %v906 = vadd.f32 %v904, 1.0
        %v907 = vadd.f32 %v905, 1.0
        %v908 = vmul.f32 %v906, 0.5
        %v909 = vmul.f32 %v907, 0.5
        %v910 = vmul.f32 %v727, %v908
        %v911 = vmul.f32 %v728, %v909
        %v912 = vadd.f32 %v619, %v910
        %v913 = vadd.f32 %v620, %v911
        %v914 = vsub.f32 1.0, %v908
        %v915 = vsub.f32 1.0, %v909
        %v916 = vmul.f32 %v835, %v914
        %v917 = vmul.f32 %v836, %v915
        %v918 = vadd.f32 %v912, %v916
        %v919 = vadd.f32 %v913, %v917
        %920 = vst [vmem:[%s294] sm:$0xff] %v918
        %921 = vst [vmem:[%s294 + $0x8] sm:$0xff] %v919
        %p922 = scmp.lt.s32.totalorder %s21, 1
        %s923 = scalar_select %p922, %s21, 1
        %p924 = scmp.lt.s32.totalorder %s22, 0
        %s925 = scalar_select %p924, %s22, 0
        %s926 = smul.addr %s925, 2
        %s927 = smul.addr %s923, 2
        %s928 = sadd.s32 %s926, %s927
        %s929 = smul.addr %s928, 8
        %s930 = scalar_lea.vmem %s5, %s929
        // Predicated region
        $region45: #{transition_forward.1} parent=39 // pred_check
          %p931 = pneg %p169
        $region46: #{transition_forward.1} parent=39 // pred_check_branch
          %933 = sbr.rel (%p931) target = $region48
        $region47: #{transition_forward.1} parent=39 // pred_region
          _
        $region48: #{transition_forward.1} parent=39 // pred_fallthru
          _
      $region40: #{transition_forward.1} parent=5 // pred_fallthru
        _
      %p934 = scmp.le.s32.totalorder 2, %s12
      // Predicated region
      $region49: #{transition_forward.1} parent=5 // pred_check
        %p935 = pneg %p934
      $region50: #{transition_forward.1} parent=5 // pred_check_branch
        %937 = sbr.rel (%p935) target = $region52
      $region51: #{transition_forward.1} parent=5 // pred_region
        %s938 = ssub.s32 %s12, 2
        // Predicated region
        $region53: #{transition_forward.1} parent=51 // pred_check
          %p939 = pneg %p175
        $region54: #{transition_forward.1} parent=51 // pred_check_branch
          %941 = sbr.rel (%p939) target = $region56
        $region55: #{transition_forward.1} parent=51 // pred_region
          %p942 = scmp.lt.s32.totalorder %s23, 1
          %s943 = scalar_select %p942, %s23, 1
          %p944 = scmp.lt.s32.totalorder %s24, 0
          %s945 = scalar_select %p944, %s24, 0
          %s946 = smul.addr %s945, 2
          %s947 = smul.addr %s943, 2
          %s948 = sadd.s32 %s946, %s947
          %s949 = smul.addr %s948, 8
          %s950 = scalar_lea.vmem %s5, %s949
        $region56: #{transition_forward.1} parent=51 // pred_fallthru
          _
      $region52: #{transition_forward.1} parent=5 // pred_fallthru
        _
    $region6: #{transition_forward.1} parent=1 // loop_footer
      %s16 = sadd.s32 1, %s12
    $region7: #{transition_forward.1} parent=1 // loop_footer_branch
      %11 = sbr.rel target = $region3
    $region8: #{transition_forward.1} parent=1 // loop_exit
      _
    %951 = vsyncpa [#allocation3], 1
    %s952 = scalar_lea.sflag [#allocation3], 1
    %953 = vsyncpa %s952, 1

</llo_original>
